<compile_context>
chip_gen: v6e
topology: v6e:2x2x1
jax: 0.10.0
libtpu: 0.0.40
codegen_flags: <defaults>
</compile_context>

<pallas_src>
import functools

import jax
import jax.numpy as jnp
from jax.experimental import pallas as pl
from jax.experimental.pallas import tpu as pltpu

GAMMA = 1.5
ALPHA = 0.25
LANES = 128
SUBLANES = 8
MAX_ROW_TILE = 4096                 # 4096 x 128 f32 block = 2 MiB
VMEM_LIMIT_BYTES = 40 * 1024 * 1024
SMALL_INPUT_ELEMS = 1 << 16         # below this never split into parts
PAD_LOGIT = -1.0e4                  # with target 0: bce==0 and loss==0


def _round_up(x, m):
    return ((x + m - 1) // m) * m


def _detect_num_tensorcores():
    """Best effort: 2 TensorCores per chip on v7x, 1 on v5e/v6e."""
    try:
        info = pltpu.get_tpu_info()
        for name in ("num_tensorcores", "tensorcore_count", "num_cores",
                     "core_count"):
            v = getattr(info, name, None)
            if v is not None and int(v) > 0:
                return int(v)
    except Exception:
        pass
    try:
        kind = jax.devices()[0].device_kind.lower()
        if "v7" in kind:
            return 2
    except Exception:
        pass
    return 1


def _focal_loss_kernel(pred_ref, true_ref, out_ref, *, gamma, alpha,
                       row_tile, rows_valid, needs_mask, approx_recip):
    i = pl.program_id(1)

    @pl.when(i == 0)
    def _():
        out_ref[...] = jnp.zeros_like(out_ref)

    x = pred_ref[...].astype(jnp.float32)
    y = true_ref[...].astype(jnp.float32)

    if needs_mask:
        # Mask out-of-bounds rows of the partial last block BEFORE any
        # transcendental so OOB garbage cannot produce NaN/Inf.
        row0 = (pl.program_id(0) * pl.num_programs(1) + i) * row_tile
        ridx = row0 + jax.lax.broadcasted_iota(jnp.int32, (row_tile, LANES), 0)
        valid = ridx < rows_valid
        x = jnp.where(valid, x, PAD_LOGIT)
        y = jnp.where(valid, y, 0.0)

    # One shared EUP exp for both the stable BCE and the sigmoid.
    e = jnp.exp(-jnp.abs(x))
    # BCEWithLogitsLoss(reduction='none'):
    #   l = max(x, 0) - x*y + log(1 + exp(-|x|))
    bce = jnp.maximum(x, 0.0) - x * y + jnp.log1p(e)

    # sigmoid(x) from the same exp: x>=0 -> 1/(1+e); x<0 -> e/(1+e)
    if approx_recip:
        inv = pl.reciprocal(1.0 + e, approx=True)
    else:
        inv = 1.0 / (1.0 + e)
    p = jnp.where(x >= 0.0, inv, e * inv)

    # z = 1 - p_t = p + y - 2*p*y ; alpha_factor = (1-a) + y*(2a-1)
    z = p + y - 2.0 * (p * y)
    alpha_factor = (1.0 - alpha) + y * (2.0 * alpha - 1.0)
    if gamma == 1.5:
        modulating_factor = z * jnp.sqrt(z)      # z**1.5 without log/exp pow
    else:
        modulating_factor = jnp.power(z, gamma)

    loss = bce * (alpha_factor * modulating_factor)

    # Per-step partial sums stay on the VPU: fold (row_tile,128) -> (8,128)
    # and accumulate into the resident output block.  The single cross-lane
    # reduction happens in the wrapper.
    out_ref[...] += jnp.sum(loss.reshape(-1, SUBLANES, LANES), axis=0)


def focal_loss(pred, true, gamma=GAMMA, alpha=ALPHA, approx_recip=True):
    """Focal loss with BCE-with-logits base loss and 'mean' reduction."""
    assert pred.shape == true.shape
    total_n = pred.size

    flat_p = pred.reshape(-1)
    flat_t = true.reshape(-1)

    # Only a sub-128-element tail (if any) is padded; the common aligned case
    # reshapes zero-copy.  Padded elements produce exactly zero loss.
    # TODO(synk): the unaligned-tail path still copies once; could be handled
    # with a tiny pure-JAX side computation instead.
    pad = (-total_n) % LANES
    if pad:
        flat_p = jnp.concatenate(
            [flat_p, jnp.full((pad,), PAD_LOGIT, dtype=flat_p.dtype)])
        flat_t = jnp.concatenate(
            [flat_t, jnp.zeros((pad,), dtype=flat_t.dtype)])
    rows_arr = (total_n + pad) // LANES
    pred2d = flat_p.reshape(rows_arr, LANES)
    true2d = flat_t.reshape(rows_arr, LANES)

    # ---- tiling: num_parts parts x `steps` tiles of `row_tile` rows --------
    num_parts = _detect_num_tensorcores()
    if total_n < SMALL_INPUT_ELEMS or rows_arr < num_parts * SUBLANES:
        num_parts = 1
    rows_per_part = _round_up(pl.cdiv(rows_arr, num_parts), SUBLANES)
    row_tile = min(MAX_ROW_TILE, rows_per_part)
    steps = pl.cdiv(rows_per_part, row_tile)
    grid_rows = num_parts * steps * row_tile
    needs_mask = grid_rows > rows_arr

    kernel = functools.partial(
        _focal_loss_kernel, gamma=gamma, alpha=alpha, row_tile=row_tile,
        rows_valid=rows_arr, needs_mask=needs_mask, approx_recip=approx_recip)

    in_map = lambda c, i: (c * steps + i, 0)

    partials = pl.pallas_call(
        kernel,
        out_shape=jax.ShapeDtypeStruct((num_parts * SUBLANES, LANES),
                                       jnp.float32),
        grid_spec=pltpu.PrefetchScalarGridSpec(
            num_scalar_prefetch=0,
            grid=(num_parts, steps),
            in_specs=[
                pl.BlockSpec((row_tile, LANES), in_map),
                pl.BlockSpec((row_tile, LANES), in_map),
            ],
            out_specs=pl.BlockSpec((SUBLANES, LANES), lambda c, i: (c, 0)),
        ),
        compiler_params=pltpu.CompilerParams(
            dimension_semantics=("parallel", "arbitrary"),
            vmem_limit_bytes=VMEM_LIMIT_BYTES),
    )(pred2d, true2d)

    # reduction == 'mean': combine the per-part (8,128) partial sums.
    return jnp.sum(partials) / jnp.float32(total_n)


def focal_loss_ref(pred, true, gamma=GAMMA, alpha=ALPHA):
    """Pure-JAX reference mirroring the PyTorch module."""
    x = pred.astype(jnp.float32)
    y = true.astype(jnp.float32)
    bce = jnp.maximum(x, 0.0) - x * y + jnp.log1p(jnp.exp(-jnp.abs(x)))
    p = jax.nn.sigmoid(x)
    p_t = y * p + (1 - y) * (1 - p)
    alpha_factor = y * alpha + (1 - y) * (1 - alpha)
    modulating_factor = (1.0 - p_t) ** gamma
    loss = bce * alpha_factor * modulating_factor
    return loss.mean()


if __name__ == "__main__":
    key = jax.random.PRNGKey(0)
    k1, k2, k3, k4 = jax.random.split(key, 4)

    # Small YOLO-like objectness/class logits: NCHW [2, 4, 16, 16]
    shape = (2, 4, 16, 16)
    pred = jax.random.normal(k1, shape, dtype=jnp.float32) * 2.0
    true = (jax.random.uniform(k2, shape, dtype=jnp.float32) > 0.7).astype(
        jnp.float32)

    out = jax.block_until_ready(focal_loss(pred, true))
    ref = focal_loss_ref(pred, true)
    assert jnp.allclose(out, ref, rtol=2e-3, atol=1e-6), (out, ref)

    # Exact-divide variant at tight tolerance (validates the math path).
    out_exact = jax.block_until_ready(focal_loss(pred, true,
                                                 approx_recip=False))
    assert jnp.allclose(out_exact, ref, rtol=2e-5, atol=1e-6), (out_exact, ref)

    # Odd shape exercising the sub-128 pad + in-kernel row masking.
    shape2 = (3, 5, 17, 19)
    pred2 = jax.random.normal(k3, shape2, dtype=jnp.float32) * 2.0
    true2 = jax.random.uniform(k4, shape2, dtype=jnp.float32)
    out2 = jax.block_until_ready(focal_loss(pred2, true2))
    ref2 = focal_loss_ref(pred2, true2)
    assert jnp.allclose(out2, ref2, rtol=2e-3, atol=1e-6), (out2, ref2)

    print("KERNEL_OK")
</pallas_src>

<mosaic_0001>
module attributes {stable_mosaic.version = 11 : i64} {
  func.func @_focal_loss_kernel(%arg0: i32, %arg1: i32, %arg2: memref<16x128xf32, #tpu.memory_space<vmem>>, %arg3: memref<16x128xf32, #tpu.memory_space<vmem>>, %arg4: memref<8x128xf32, #tpu.memory_space<vmem>>) attributes {dimension_semantics = [#tpu.dimension_semantics<parallel>, #tpu.dimension_semantics<arbitrary>], iteration_bounds = array<i64: 1, 1>, scalar_prefetch = 0 : i64, scratch_operands = 0 : i64, tpu.core_type = #tpu.core_type<tc>, window_params = [{transform_indices = @transform_0, window_bounds = array<i64: 16, 128>}, {transform_indices = @transform_1, window_bounds = array<i64: 16, 128>}, {transform_indices = @transform_2, window_bounds = array<i64: 8, 128>}]} {
    %c0_i32 = arith.constant 0 : i32
    %0 = arith.cmpi eq, %arg1, %c0_i32 : i32
    %1 = arith.extui %0 : i1 to i32
    %c0_i32_0 = arith.constant 0 : i32
    %2 = arith.cmpi ne, %1, %c0_i32_0 : i32
    scf.if %2 {
      %cst_15 = arith.constant 0.000000e+00 : f32
      %40 = vector.broadcast %cst_15 : f32 to vector<8x128xf32>
      %c0_16 = arith.constant 0 : index
      %c0_17 = arith.constant 0 : index
      %41 = vector.load %arg4[%c0_16, %c0_17] : memref<8x128xf32, #tpu.memory_space<vmem>>, vector<8x128xf32>
      tpu.vector_store %arg4[%c0_16, %c0_17], %40 {strides = array<i32>} : memref<8x128xf32, #tpu.memory_space<vmem>>, vector<8x128xf32>,
    } else {
    }
    %c0 = arith.constant 0 : index
    %c0_1 = arith.constant 0 : index
    %3 = vector.load %arg2[%c0, %c0_1] : memref<16x128xf32, #tpu.memory_space<vmem>>, vector<16x128xf32>
    %c0_2 = arith.constant 0 : index
    %c0_3 = arith.constant 0 : index
    %4 = vector.load %arg3[%c0_2, %c0_3] : memref<16x128xf32, #tpu.memory_space<vmem>>, vector<16x128xf32>
    %5 = math.absf %3 : vector<16x128xf32>
    %cst = arith.constant 0.000000e+00 : f32
    %6 = vector.broadcast %cst : f32 to vector<16x128xf32>
    %7 = arith.subf %6, %5 : vector<16x128xf32>
    %8 = math.exp %7 : vector<16x128xf32>
    %cst_4 = arith.constant 0.000000e+00 : f32
    %9 = vector.broadcast %cst_4 : f32 to vector<16x128xf32>
    %10 = arith.maximumf %3, %9 : vector<16x128xf32>
    %11 = arith.mulf %3, %4 : vector<16x128xf32>
    %12 = arith.subf %10, %11 : vector<16x128xf32>
    %13 = math.log1p %8 : vector<16x128xf32>
    %14 = arith.addf %12, %13 : vector<16x128xf32>
    %cst_5 = arith.constant 1.000000e+00 : f32
    %15 = vector.broadcast %cst_5 : f32 to vector<16x128xf32>
    %16 = arith.addf %15, %8 : vector<16x128xf32>
    %17 = tpu.reciprocal %16 {approx = true} : vector<16x128xf32> -> vector<16x128xf32>
    %cst_6 = arith.constant 0.000000e+00 : f32
    %18 = vector.broadcast %cst_6 : f32 to vector<16x128xf32>
    %19 = arith.cmpf oge, %3, %18 : vector<16x128xf32>
    %20 = arith.mulf %8, %17 : vector<16x128xf32>
    %21 = arith.select %19, %17, %20 : vector<16x128xi1>, vector<16x128xf32>
    %22 = arith.addf %21, %4 : vector<16x128xf32>
    %23 = arith.mulf %21, %4 : vector<16x128xf32>
    %cst_7 = arith.constant 2.000000e+00 : f32
    %24 = vector.broadcast %cst_7 : f32 to vector<16x128xf32>
    %25 = arith.mulf %24, %23 : vector<16x128xf32>
    %26 = arith.subf %22, %25 : vector<16x128xf32>
    %cst_8 = arith.constant -5.000000e-01 : f32
    %27 = vector.broadcast %cst_8 : f32 to vector<16x128xf32>
    %28 = arith.mulf %4, %27 : vector<16x128xf32>
    %cst_9 = arith.constant 7.500000e-01 : f32
    %29 = vector.broadcast %cst_9 : f32 to vector<16x128xf32>
    %30 = arith.addf %29, %28 : vector<16x128xf32>
    %31 = math.sqrt %26 : vector<16x128xf32>
    %32 = arith.mulf %26, %31 : vector<16x128xf32>
    %33 = arith.mulf %30, %32 : vector<16x128xf32>
    %34 = arith.mulf %14, %33 : vector<16x128xf32>
    %c0_10 = arith.constant 0 : index
    %c0_11 = arith.constant 0 : index
    %35 = vector.load %arg4[%c0_10, %c0_11] : memref<8x128xf32, #tpu.memory_space<vmem>>, vector<8x128xf32>
    %36 = vector.shape_cast %34 : vector<16x128xf32> to vector<2x8x128xf32>
    %cst_12 = arith.constant dense<0.000000e+00> : vector<8x128xf32>
    %37 = vector.multi_reduction <add>, %36, %cst_12 [0] : vector<2x8x128xf32> to vector<8x128xf32>
    %38 = arith.addf %35, %37 : vector<8x128xf32>
    %c0_13 = arith.constant 0 : index
    %c0_14 = arith.constant 0 : index
    %39 = vector.load %arg4[%c0_13, %c0_14] : memref<8x128xf32, #tpu.memory_space<vmem>>, vector<8x128xf32>
    tpu.vector_store %arg4[%c0_13, %c0_14], %38 {strides = array<i32>} : memref<8x128xf32, #tpu.memory_space<vmem>>, vector<8x128xf32>,
    return
  }
  func.func @transform_0(%arg0: i32, %arg1: i32) -> (i32, i32) {
    %c1_i32 = arith.constant 1 : i32
    %0 = arith.muli %arg0, %c1_i32 : i32
    %1 = arith.addi %0, %arg1 : i32
    %c0_i32 = arith.constant 0 : i32
    %c0_i32_0 = arith.constant 0 : i32
    return %1, %c0_i32 : i32, i32
  }
  func.func @transform_1(%arg0: i32, %arg1: i32) -> (i32, i32) {
    %c1_i32 = arith.constant 1 : i32
    %0 = arith.muli %arg0, %c1_i32 : i32
    %1 = arith.addi %0, %arg1 : i32
    %c0_i32 = arith.constant 0 : i32
    %c0_i32_0 = arith.constant 0 : i32
    return %1, %c0_i32 : i32, i32
  }
  func.func @transform_2(%arg0: i32, %arg1: i32) -> (i32, i32) {
    %c0_i32 = arith.constant 0 : i32
    %c0_i32_0 = arith.constant 0 : i32
    return %arg0, %c0_i32 : i32, i32
  }
}

</mosaic_0001>

<llo_original>
// kernel: tpu_custom_call.1
$region0: #{tpu_custom_call.1}
  #allocation0 [shape = 'u32[]', space=smem, size = 0x4, offset = 0x4, fixed_abs, tag = 'smem constant byte address 0x4 - core index']
  #allocation1 [shape = 'u32[144,128]{1,0:T(1,128)}', space=vmem, size = 0x12000, scoped, tag = 'internal scratch']
  %s0 = inlined_call_operand.hbm [shape: f32[16,128], index: 0, kind: input, shape index: {}]
  %s1 = inlined_call_operand.hbm [shape: f32[16,128], index: 1, kind: input, shape index: {}]
  %s2 = inlined_call_operand.hbm [shape: f32[8,128], index: 2, kind: output, shape index: {}]
  %s3 = sld [smem:[#allocation0]]
  $region30: #{tpu_custom_call.1} parent=0
    _
  %s5 = ssub.s32 1, %s3
  %s6 = scalar_select 0, %s5, %s3
  $region1: #{tpu_custom_call.1} parent=0
    #allocation2 [shape = 'u8[8192]{0}', space=vmem, size = 0x2000, scoped, tag = 'input window, operand 0, single buffered']
    #allocation3 [shape = 's32[1]{0}', space=sflag, size = 0x4, scoped, tag = 'scoped memory for tpu_custom_call.1']
    #allocation4 [shape = 's32[1]{0}', space=sflag, size = 0x4, scoped, tag = 'scoped memory for tpu_custom_call.1']
    #allocation5 [shape = 'u8[8192]{0}', space=vmem, size = 0x2000, scoped, tag = 'input window, operand 1, single buffered']
    #allocation6 [shape = 's32[1]{0}', space=sflag, size = 0x4, scoped, tag = 'scoped memory for tpu_custom_call.1']
    #allocation7 [shape = 'u8[4096]{0}', space=vmem, size = 0x1000, scoped, tag = 'output window, operand 0, single buffered']
    %7 = vsyncpa [#allocation3], 0
    %8 = vsyncpa [#allocation6], 0
    %9 = vsyncpa [#allocation4], 0
    // Predicated region
    $region2: #{tpu_custom_call.1} parent=1 // pred_check
      _
    $region3: #{tpu_custom_call.1} parent=1 // pred_check_branch
      %11 = sbr.rel (0) target = $region5
    $region4: #{tpu_custom_call.1} parent=1 // pred_region
      %s12 = sadd.s32 0, 0
      %s13 = smul.u32 2, %s12
      %s15 = ssub.s32 256, 256
      %16 = vsyncadd [#allocation3], %s15
      %s17 = smul.addr %s13, 128
      %s18 = scalar_lea.hbm %s0, %s17
      %s19 = sshll.u32 [#allocation2], 4
      %s20 = int_to_ptr.vmem [resolvable:$true] %s19
      %25 = dma.hbm_to_vmem [thread:$0]  %s18, 256, %s20, [#allocation3], 128, 128, 8
    $region5: #{tpu_custom_call.1} parent=1 // pred_fallthru
      _
    // Predicated region
    $region6: #{tpu_custom_call.1} parent=1 // pred_check
      _
    $region7: #{tpu_custom_call.1} parent=1 // pred_check_branch
      %27 = sbr.rel (0) target = $region9
    $region8: #{tpu_custom_call.1} parent=1 // pred_region
      %s28 = sadd.s32 0, 0
      %s29 = smul.u32 2, %s28
      %s31 = ssub.s32 256, 256
      %32 = vsyncadd [#allocation6], %s31
      %s33 = smul.addr %s29, 128
      %s34 = scalar_lea.hbm %s1, %s33
      %s35 = sshll.u32 [#allocation5], 4
      %s36 = int_to_ptr.vmem [resolvable:$true] %s35
      %41 = dma.hbm_to_vmem [thread:$0]  %s34, 256, %s36, [#allocation6], 128, 128, 8
    $region9: #{tpu_custom_call.1} parent=1 // pred_fallthru
      _
    // Predicated region
    $region10: #{tpu_custom_call.1} parent=1 // pred_check
      _
    $region11: #{tpu_custom_call.1} parent=1 // pred_check_branch
      %43 = sbr.rel (0) target = $region13
    $region12: #{tpu_custom_call.1} parent=1 // pred_region
      %44 = dma.done [#allocation3], 256
    $region13: #{tpu_custom_call.1} parent=1 // pred_fallthru
      _
    // Predicated region
    $region14: #{tpu_custom_call.1} parent=1 // pred_check
      _
    $region15: #{tpu_custom_call.1} parent=1 // pred_check_branch
      %46 = sbr.rel (0) target = $region17
    $region16: #{tpu_custom_call.1} parent=1 // pred_region
      %47 = dma.done [#allocation6], 256
    $region17: #{tpu_custom_call.1} parent=1 // pred_fallthru
      _
    %s48 = sadd.s32 0, 0
    %s49 = smul.u32 2, %s48
    %s50 = sadd.s32 0, 0
    %s51 = smul.u32 2, %s50
    %p52 = scmp.eq.s32.totalorder 0, 0
    // Predicated region
    $region18: #{tpu_custom_call.1} parent=1 // pred_check
      %p53 = pneg %p52
    $region19: #{tpu_custom_call.1} parent=1 // pred_check_branch
      %55 = sbr.rel (%p53) target = $region21
    $region20: #{tpu_custom_call.1} parent=1 // pred_region
      %56 = vst [vmem:[#allocation7] sm:$0xff] 0.0
    $region21: #{tpu_custom_call.1} parent=1 // pred_fallthru
      _
    %v57 = vld [vmem:[#allocation2] sm:$0xff]
    %v58 = vld [vmem:[#allocation2 + $0x8] sm:$0xff]
    %v59 = vld [vmem:[#allocation5] sm:$0xff]
    %v60 = vld [vmem:[#allocation5 + $0x8] sm:$0xff]
    %v61 = vand.u32 2147483647, %v57
    %v62 = vand.u32 2147483647, %v58
    %v63 = vsub.f32 0.0, %v61
    %v64 = vsub.f32 0.0, %v62
    %v65 = vmul.f32 %v63, 1.442695
    %v66 = vpow.pop %v65
    %v67 = vmul.f32 %v64, 1.442695
    %v68 = vpow.pop %v67
    %v69 = vmax.f32 %v57, 0.0
    %v70 = vmax.f32 %v58, 0.0
    %v71 = vmul.f32 %v57, %v59
    %v72 = vmul.f32 %v58, %v60
    %v73 = vsub.f32 %v69, %v71
    %v74 = vsub.f32 %v70, %v72
    %v75 = vadd.f32 %v66, 1.0
    %v76 = vlog2.pop %v75
    %v77 = vmul.f32 %v76, 0.6931472
    %v78 = vmul.f32 -0.5, %v66
    %v79 = vadd.f32 %v78, 1.0
    %v80 = vmul.f32 %v79, %v66
    %v81 = vand.u32 2147483647, %v66
    %vm82 = vcmp.lt.f32.partialorder %v81, 0.0004427343
    %v83 = vsel %vm82, %v80, %v77
    %v84 = vadd.f32 %v68, 1.0
    %v85 = vlog2.pop %v84
    %v86 = vmul.f32 %v85, 0.6931472
    %v87 = vmul.f32 -0.5, %v68
    %v88 = vadd.f32 %v87, 1.0
    %v89 = vmul.f32 %v88, %v68
    %v90 = vand.u32 2147483647, %v68
    %vm91 = vcmp.lt.f32.partialorder %v90, 0.0004427343
    %v92 = vsel %vm91, %v89, %v86
    %v93 = vadd.f32 %v73, %v83
    %v94 = vadd.f32 %v74, %v92
    %v95 = vadd.f32 %v66, 1.0
    %v96 = vadd.f32 %v68, 1.0
    %v97 = vrcp.pop %v95
    %v98 = vrcp.pop %v96
    %vm99 = vcmp.ge.f32.partialorder %v57, 0.0
    %vm100 = vcmp.ge.f32.partialorder %v58, 0.0
    %v101 = vmul.f32 %v66, %v97
    %v102 = vmul.f32 %v68, %v98
    %v103 = vsel %vm99, %v97, %v101
    %v104 = vsel %vm100, %v98, %v102
    %v105 = vadd.f32 %v103, %v59
    %v106 = vadd.f32 %v104, %v60
    %v107 = vmul.f32 %v103, %v59
    %v108 = vmul.f32 %v104, %v60
    %v109 = vmul.f32 %v107, 2.0
    %v110 = vmul.f32 %v108, 2.0
    %v111 = vsub.f32 %v105, %v109
    %v112 = vsub.f32 %v106, %v110
    %v113 = vmul.f32 %v59, -0.5
    %v114 = vmul.f32 %v60, -0.5
    %v115 = vadd.f32 %v113, 0.75
    %v116 = vadd.f32 %v114, 0.75
    %v117 = vrsqrt.pop %v111
    %v118 = vmul.f32 %v111, %v117
    %vm119 = vcmp.eq.f32.partialorder %v111, inf
    %v120 = vsel %vm119, %v111, %v118
    %vm121 = vcmp.eq.f32.partialorder %v111, 0.0
    %v122 = vand.u32 %v111, 2147483648
    %v123 = vsel %vm121, %v122, %v120
    %v124 = vrsqrt.pop %v112
    %v125 = vmul.f32 %v112, %v124
    %vm126 = vcmp.eq.f32.partialorder %v112, inf
    %v127 = vsel %vm126, %v112, %v125
    %vm128 = vcmp.eq.f32.partialorder %v112, 0.0
    %v129 = vand.u32 %v112, 2147483648
    %v130 = vsel %vm128, %v129, %v127
    %v131 = vmul.f32 %v111, %v123
    %v132 = vmul.f32 %v112, %v130
    %v133 = vmul.f32 %v115, %v131
    %v134 = vmul.f32 %v116, %v132
    %v135 = vmul.f32 %v93, %v133
    %v136 = vmul.f32 %v94, %v134
    %v137 = vld [vmem:[#allocation7] sm:$0xff]
    %v138 = vadd.f32 %v135, %v136
    %v139 = vadd.f32 %v137, %v138
    %140 = vst [vmem:[#allocation7] sm:$0xff] %v139
    // Predicated region
    $region22: #{tpu_custom_call.1} parent=1 // pred_check
      _
    $region23: #{tpu_custom_call.1} parent=1 // pred_check_branch
      %142 = sbr.rel (0) target = $region25
    $region24: #{tpu_custom_call.1} parent=1 // pred_region
      %s144 = ssub.s32 128, 128
      %145 = vsyncadd [#allocation4], %s144
      %s147 = sshll.u32 [#allocation7], 4
      %s148 = int_to_ptr.vmem [resolvable:$true] %s147
      %150 = dma.vmem_to_hbm [thread:$0]  %s148, 128, %s2, [#allocation4]
    $region25: #{tpu_custom_call.1} parent=1 // pred_fallthru
      _
    // Predicated region
    $region26: #{tpu_custom_call.1} parent=1 // pred_check
      _
    $region27: #{tpu_custom_call.1} parent=1 // pred_check_branch
      %152 = sbr.rel (0) target = $region29
    $region28: #{tpu_custom_call.1} parent=1 // pred_region
      %153 = dma.done [#allocation4], 128
    $region29: #{tpu_custom_call.1} parent=1 // pred_fallthru
      _
    %154 = vsyncpa [#allocation3], 1
    %155 = vsyncpa [#allocation6], 1
    %156 = vsyncpa [#allocation4], 1

</llo_original>
